<compile_context>
chip_gen: v5e
topology: v5e:2x2
jax: 0.10.0
libtpu: 0.0.40
codegen_flags: <defaults>
</compile_context>

<pallas_src>
import functools

import jax
import jax.numpy as jnp
from jax.experimental import pallas as pl
from jax.experimental.pallas import tpu as pltpu

_LANE = 128


def _round_up(x, m):
    return ((x + m - 1) // m) * m


def _round_down(x, m):
    return max(m, (x // m) * m)


def _sublane_multiple(itemsize):
    # Sub-32-bit dtypes pack 2/4 rows per sublane; row-block counts must match.
    return {4: 8, 2: 16, 1: 32}.get(int(itemsize), 8)


def _vmem_budget_bytes():
    # Half of physical VMEM: ~64 MiB on v5e/v6e (128 MiB parts), 32 MiB on v7x.
    try:
        cap = pltpu.get_tpu_info().vmem_capacity_bytes
    except Exception:  # conservative fallback: v7x-sized VMEM
        cap = 64 * 1024 * 1024
    return max(16 * 1024 * 1024, cap // 2)


def _tensorcores_per_chip():
    # TODO(synk): no stable per-chip TensorCore count in the public TpuInfo;
    # detect 2-TC v7x parts from the device kind string (v5e/v6e are 1 TC).
    try:
        kind = jax.devices()[0].device_kind.lower()
    except Exception:
        return 1
    return 2 if "v7" in kind else 1


def _choose_rows_block(bc, max_rows, sub, n_cores):
    """Largest legal row block (multiple of sub, or the full bc) fitting the
    VMEM budget; on 2-TC parts, nudge the grid so step count splits evenly."""
    cap = min(bc, max(sub, max_rows))
    if cap >= bc:
        # Everything fits in one resident block.  Only split it when there are
        # multiple TensorCores to feed (a serial split on 1-TC parts is pure
        # overhead for a mem-bound kernel); the split yields exactly 2 steps.
        if n_cores > 1 and bc >= 2 * sub:
            return _round_up(-(-bc // 2), sub)
        return bc
    rows = _round_down(cap, sub)
    if n_cores > 1:
        steps = -(-bc // rows)
        if steps % n_cores:
            # Look for a slightly smaller block whose step count is a multiple
            # of the core count (better load balance), without more than
            # doubling the step count.  Trace-time loop, tiny.
            cand = rows - sub
            while cand >= sub:
                s = -(-bc // cand)
                if s > 2 * steps:
                    break
                if s % n_cores == 0:
                    return cand
                cand -= sub
    return rows


def _adain_rows_kernel(x_ref, o_ref, *, eps, inv_n):
    # x_ref / o_ref: (rows_block, hw) tiles holding the *full* spatial extent
    # per row, so the lane reductions are exact (no padded columns).
    # Two-pass statistics in f32 (mean, then centered sum of squares): robust
    # against E[x^2]-E[x]^2 cancellation and free -- XLU/VALU/EUP hide under
    # the DMA stream.  Edge row-blocks may contain unspecified rows; rows are
    # independent and Pallas masks their writeback.
    x = x_ref[...].astype(jnp.float32)
    mean = jnp.sum(x, axis=-1, keepdims=True) * jnp.float32(inv_n)
    centered = x - mean
    var = jnp.sum(centered * centered, axis=-1, keepdims=True) * jnp.float32(inv_n)
    inv_std = jax.lax.rsqrt(var + jnp.float32(eps))
    # Re-read + re-cast x for the final normalize instead of keeping a full
    # f32 temporary live across the rsqrt: one fewer block-sized f32 buffer in
    # VMEM (matters most for sub-32-bit inputs); the recompute is free filler.
    o_ref[...] = ((x_ref[...].astype(jnp.float32) - mean) * inv_std).astype(o_ref.dtype)


def _adain_stats_kernel(x_ref, mean_ref, rstd_ref, sx_ref, sxx_ref, *,
                        eps, inv_n, hw, cols_block, mask_cols):
    # Column-tiled pass 1: accumulate per-row sum / sum-of-squares across
    # column blocks into VMEM scratch; emit mean and 1/std at the last step.
    j = pl.program_id(1)

    @pl.when(j == 0)
    def _():
        sx_ref[...] = jnp.zeros_like(sx_ref)
        sxx_ref[...] = jnp.zeros_like(sxx_ref)

    x = x_ref[...].astype(jnp.float32)
    if mask_cols:
        # Ragged last column block: out-of-bounds lanes hold unspecified data,
        # so mask them out of the sums (static no-op when hw % cols_block == 0).
        col = j * cols_block + jax.lax.broadcasted_iota(jnp.int32, x.shape, 1)
        x = jnp.where(col < hw, x, 0.0)
    sx_ref[...] += jnp.sum(x, axis=-1, keepdims=True)
    sxx_ref[...] += jnp.sum(x * x, axis=-1, keepdims=True)

    @pl.when(j == pl.num_programs(1) - 1)
    def _():
        m = sx_ref[...] * jnp.float32(inv_n)
        # TODO(synk): one-pass E[x^2]-E[x]^2 here (a two-pass scheme would need
        # a third full HBM read of x); the clamp guards cancellation.
        v = jnp.maximum(sxx_ref[...] * jnp.float32(inv_n) - m * m, 0.0)
        mean_ref[...] = m
        rstd_ref[...] = jax.lax.rsqrt(v + jnp.float32(eps))


def _adain_apply_kernel(x_ref, mean_ref, rstd_ref, o_ref):
    # Column-tiled pass 2: stream x again and normalize with per-row stats.
    x = x_ref[...].astype(jnp.float32)
    o_ref[...] = ((x - mean_ref[...]) * rstd_ref[...]).astype(o_ref.dtype)


def adain_forward(x, eps=1e-5, *, block_budget_bytes=None):
    """x: (B, C, H, W). Returns instance-normalized x, same shape/dtype.

    block_budget_bytes only overrides the tile-sizing budget (used by tests to
    force the small-tile / column-tiled paths); the requested vmem_limit_bytes
    always comes from the hardware.
    """
    b, c, h, w = x.shape
    bc = b * c
    hw = h * w
    itemsize = jnp.dtype(x.dtype).itemsize
    sub = _sublane_multiple(itemsize)
    inv_n = 1.0 / float(hw)

    vmem_limit = _vmem_budget_bytes()
    budget = int(block_budget_bytes) if block_budget_bytes else vmem_limit
    n_cores = _tensorcores_per_chip()

    x2d = x.reshape(bc, hw)  # contiguous view; no HBM copy

    # Per-row VMEM footprint of the fused row path: double-buffered input +
    # output blocks (input dtype) plus ~3 block-sized f32 temporaries.
    per_elem_row = 4 * itemsize + 12
    max_rows = budget // (hw * per_elem_row)

    if bc <= max_rows or max_rows >= sub:
        # ---- Row-tiled path: each block holds full rows -> one fused pass,
        # exactly one HBM read + one HBM write of x.
        rows_block = _choose_rows_block(bc, int(max_rows), sub, n_cores)
        grid = (pl.cdiv(bc, rows_block),)
        out2d = pl.pallas_call(
            functools.partial(_adain_rows_kernel, eps=eps, inv_n=inv_n),
            out_shape=jax.ShapeDtypeStruct((bc, hw), x.dtype),
            grid_spec=pltpu.PrefetchScalarGridSpec(
                num_scalar_prefetch=0,
                grid=grid,
                in_specs=[pl.BlockSpec((rows_block, hw), lambda i: (i, 0))],
                out_specs=pl.BlockSpec((rows_block, hw), lambda i: (i, 0)),
            ),
            compiler_params=pltpu.CompilerParams(
                dimension_semantics=("parallel",),
                vmem_limit_bytes=vmem_limit,
            ),
            cost_estimate=pl.CostEstimate(
                flops=6 * bc * hw,
                transcendentals=bc,
                bytes_accessed=2 * bc * hw * itemsize,  # exact: no padding
            ),
        )(x2d)
        return out2d.reshape(b, c, h, w)

    # ---- Column-tiled fallback (very large H*W, e.g. 512x512 f32 on v7x):
    # pass 1 accumulates per-row stats across column blocks (scratch
    # accumulators, column axis "arbitrary"); pass 2 streams x again and
    # applies (x - mean) * rstd.  3 HBM passes total, but every block stays in
    # the few-MiB sweet spot on all generations instead of blowing VMEM.
    rows_block = min(bc, sub)
    per_elem_col = 4 * itemsize + 12
    cols_budget = budget // (rows_block * per_elem_col)
    target_cols = min(cols_budget, (4 * 1024 * 1024) // (rows_block * 4))
    cols_block = max(_LANE, _round_down(int(target_cols), _LANE))
    cols_block = min(cols_block, max(_LANE, _round_down(hw, _LANE)))
    n_row_blocks = pl.cdiv(bc, rows_block)
    n_col_blocks = pl.cdiv(hw, cols_block)
    mask_cols = (hw % cols_block) != 0

    mean2d, rstd2d = pl.pallas_call(
        functools.partial(
            _adain_stats_kernel, eps=eps, inv_n=inv_n, hw=hw,
            cols_block=cols_block, mask_cols=mask_cols),
        out_shape=(
            jax.ShapeDtypeStruct((bc, 1), jnp.float32),
            jax.ShapeDtypeStruct((bc, 1), jnp.float32),
        ),
        grid_spec=pltpu.PrefetchScalarGridSpec(
            num_scalar_prefetch=0,
            grid=(n_row_blocks, n_col_blocks),
            in_specs=[pl.BlockSpec((rows_block, cols_block), lambda i, j: (i, j))],
            out_specs=(
                pl.BlockSpec((rows_block, 1), lambda i, j: (i, 0)),
                pl.BlockSpec((rows_block, 1), lambda i, j: (i, 0)),
            ),
            scratch_shapes=[
                pltpu.VMEM((rows_block, 1), jnp.float32),
                pltpu.VMEM((rows_block, 1), jnp.float32),
            ],
        ),
        compiler_params=pltpu.CompilerParams(
            dimension_semantics=("parallel", "arbitrary"),
            vmem_limit_bytes=vmem_limit,
        ),
        cost_estimate=pl.CostEstimate(
            flops=4 * bc * hw,
            transcendentals=bc,
            bytes_accessed=bc * hw * itemsize + 2 * bc * 4,
        ),
    )(x2d)

    out2d = pl.pallas_call(
        _adain_apply_kernel,
        out_shape=jax.ShapeDtypeStruct((bc, hw), x.dtype),
        grid_spec=pltpu.PrefetchScalarGridSpec(
            num_scalar_prefetch=0,
            grid=(n_row_blocks, n_col_blocks),
            in_specs=[
                pl.BlockSpec((rows_block, cols_block), lambda i, j: (i, j)),
                pl.BlockSpec((rows_block, 1), lambda i, j: (i, 0)),
                pl.BlockSpec((rows_block, 1), lambda i, j: (i, 0)),
            ],
            out_specs=pl.BlockSpec((rows_block, cols_block), lambda i, j: (i, j)),
        ),
        compiler_params=pltpu.CompilerParams(
            dimension_semantics=("parallel", "parallel"),
            vmem_limit_bytes=vmem_limit,
        ),
        cost_estimate=pl.CostEstimate(
            flops=2 * bc * hw,
            transcendentals=0,
            bytes_accessed=2 * bc * hw * itemsize + 2 * bc * 4,
        ),
    )(x2d, mean2d, rstd2d)
    return out2d.reshape(b, c, h, w)


def adain_reference(x, eps=1e-5):
    # Pure-JAX reference matching F.batch_norm(training=True) on (1, B*C, H, W).
    xf = x.astype(jnp.float32)
    mean = jnp.mean(xf, axis=(2, 3), keepdims=True)
    var = jnp.mean((xf - mean) ** 2, axis=(2, 3), keepdims=True)
    return ((xf - mean) / jnp.sqrt(var + eps)).astype(x.dtype)


if __name__ == "__main__":
    key = jax.random.PRNGKey(0)

    # 1) Primary: module-consistent shape; single resident block, no padding.
    B, C, H, W = 2, 4, 16, 16
    x = jax.random.normal(key, (B, C, H, W), dtype=jnp.float32) * 2.0 + 0.5
    out = jax.block_until_ready(adain_forward(x))
    ref = adain_reference(x)
    assert out.shape == x.shape and out.dtype == x.dtype
    assert jnp.allclose(out, ref, atol=2e-5, rtol=2e-5), float(
        jnp.max(jnp.abs(out - ref)))

    # 2) Non-tile-aligned rows and lane-sparse spatial dims (bc=6, hw=49):
    #    exercises the unpadded full-dim block path (masked partial stores).
    x2 = jax.random.normal(jax.random.PRNGKey(1), (2, 3, 7, 7), jnp.float32) - 1.0
    out2 = jax.block_until_ready(adain_forward(x2))
    ref2 = adain_reference(x2)
    assert out2.shape == x2.shape
    assert jnp.allclose(out2, ref2, atol=2e-5, rtol=2e-5), float(
        jnp.max(jnp.abs(out2 - ref2)))

    # 3) Ragged row grid in the row-tiled path (bc=20, rows_block=8 forced by a
    #    small tiling budget): last row block is partial and masked by Pallas.
    x3 = jax.random.normal(jax.random.PRNGKey(2), (4, 5, 16, 16), jnp.float32) * 1.5
    out3 = jax.block_until_ready(adain_forward(x3, block_budget_bytes=60 * 1024))
    ref3 = adain_reference(x3)
    assert jnp.allclose(out3, ref3, atol=2e-5, rtol=2e-5), float(
        jnp.max(jnp.abs(out3 - ref3)))

    # 4) Column-tiled fallback (forced by a tiny tiling budget): exercises the
    #    two-kernel stats+apply path with ragged row AND column edges.
    x4 = jax.random.normal(jax.random.PRNGKey(3), (2, 5, 24, 40), jnp.float32) * 1.5 + 0.5
    out4 = jax.block_until_ready(adain_forward(x4, block_budget_bytes=40 * 1024))
    ref4 = adain_reference(x4)
    assert jnp.allclose(out4, ref4, atol=1e-4, rtol=1e-4), float(
        jnp.max(jnp.abs(out4 - ref4)))

    print("KERNEL_OK")
</pallas_src>

<mosaic_0001>
module attributes {stable_mosaic.version = 11 : i64} {
  func.func @_adain_rows_kernel(%arg0: i32, %arg1: memref<8x256xf32, #tpu.memory_space<vmem>>, %arg2: memref<8x256xf32, #tpu.memory_space<vmem>>) attributes {dimension_semantics = [#tpu.dimension_semantics<parallel>], iteration_bounds = array<i64: 1>, scalar_prefetch = 0 : i64, scratch_operands = 0 : i64, tpu.core_type = #tpu.core_type<tc>, window_params = [{transform_indices = @transform_0, window_bounds = array<i64: 8, 256>}, {transform_indices = @transform_1, window_bounds = array<i64: 8, 256>}]} {
    %c0 = arith.constant 0 : index
    %c0_0 = arith.constant 0 : index
    %0 = vector.load %arg1[%c0, %c0_0] : memref<8x256xf32, #tpu.memory_space<vmem>>, vector<8x256xf32>
    %cst = arith.constant dense<0.000000e+00> : vector<8xf32>
    %1 = vector.multi_reduction <add>, %0, %cst [1] : vector<8x256xf32> to vector<8xf32>
    %2 = vector.shape_cast %1 : vector<8xf32> to vector<8x1xf32>
    %cst_1 = arith.constant 3.906250e-03 : f32
    %3 = vector.broadcast %cst_1 : f32 to vector<8x1xf32>
    %4 = arith.mulf %2, %3 : vector<8x1xf32>
    %5 = vector.broadcast %4 : vector<8x1xf32> to vector<8x256xf32>
    %6 = arith.subf %0, %5 : vector<8x256xf32>
    %7 = arith.mulf %6, %6 : vector<8x256xf32>
    %cst_2 = arith.constant dense<0.000000e+00> : vector<8xf32>
    %8 = vector.multi_reduction <add>, %7, %cst_2 [1] : vector<8x256xf32> to vector<8xf32>
    %9 = vector.shape_cast %8 : vector<8xf32> to vector<8x1xf32>
    %cst_3 = arith.constant 3.906250e-03 : f32
    %10 = vector.broadcast %cst_3 : f32 to vector<8x1xf32>
    %11 = arith.mulf %9, %10 : vector<8x1xf32>
    %cst_4 = arith.constant 9.99999974E-6 : f32
    %12 = vector.broadcast %cst_4 : f32 to vector<8x1xf32>
    %13 = arith.addf %11, %12 : vector<8x1xf32>
    %14 = math.rsqrt %13 : vector<8x1xf32>
    %c0_5 = arith.constant 0 : index
    %c0_6 = arith.constant 0 : index
    %15 = vector.load %arg1[%c0_5, %c0_6] : memref<8x256xf32, #tpu.memory_space<vmem>>, vector<8x256xf32>
    %16 = vector.broadcast %4 : vector<8x1xf32> to vector<8x256xf32>
    %17 = arith.subf %15, %16 : vector<8x256xf32>
    %18 = vector.broadcast %14 : vector<8x1xf32> to vector<8x256xf32>
    %19 = arith.mulf %17, %18 : vector<8x256xf32>
    %c0_7 = arith.constant 0 : index
    %c0_8 = arith.constant 0 : index
    %20 = vector.load %arg2[%c0_7, %c0_8] : memref<8x256xf32, #tpu.memory_space<vmem>>, vector<8x256xf32>
    tpu.vector_store %arg2[%c0_7, %c0_8], %19 {strides = array<i32>} : memref<8x256xf32, #tpu.memory_space<vmem>>, vector<8x256xf32>,
    return
  }
  func.func @transform_0(%arg0: i32) -> (i32, i32) {
    %c0_i32 = arith.constant 0 : i32
    %c0_i32_0 = arith.constant 0 : i32
    return %arg0, %c0_i32 : i32, i32
  }
  func.func @transform_1(%arg0: i32) -> (i32, i32) {
    %c0_i32 = arith.constant 0 : i32
    %c0_i32_0 = arith.constant 0 : i32
    return %arg0, %c0_i32 : i32, i32
  }
}

</mosaic_0001>

<llo_original>
// kernel: tpu_custom_call.1
$region0: #{tpu_custom_call.1}
  #allocation0 [shape = 'u32[]', space=smem, size = 0x4, offset = 0x4, fixed_abs, tag = 'smem constant byte address 0x4 - core index']
  #allocation1 [shape = 'u32[72,128]{1,0:T(1,128)}', space=vmem, size = 0x9000, scoped, tag = 'internal scratch']
  %s0 = inlined_call_operand.hbm [shape: f32[8,256], index: 0, kind: input, shape index: {}]
  %s1 = inlined_call_operand.hbm [shape: f32[8,256], index: 1, kind: output, shape index: {}]
  %s2 = sld [smem:[#allocation0]]
  $region18: #{tpu_custom_call.1} parent=0
    _
  %s4 = ssub.s32 1, %s2
  %s5 = scalar_select 0, %s4, %s2
  $region1: #{tpu_custom_call.1} parent=0
    #allocation2 [shape = 'u8[8192]{0}', space=vmem, size = 0x2000, scoped, tag = 'input window, operand 0, single buffered']
    #allocation3 [shape = 's32[1]{0}', space=sflag, size = 0x4, scoped, tag = 'scoped memory for tpu_custom_call.1']
    #allocation4 [shape = 's32[1]{0}', space=sflag, size = 0x4, scoped, tag = 'scoped memory for tpu_custom_call.1']
    #allocation5 [shape = 'u8[8192]{0}', space=vmem, size = 0x2000, scoped, tag = 'output window, operand 0, single buffered']
    %6 = vsyncpa [#allocation3], 0
    %7 = vsyncpa [#allocation4], 0
    // Predicated region
    $region2: #{tpu_custom_call.1} parent=1 // pred_check
      _
    $region3: #{tpu_custom_call.1} parent=1 // pred_check_branch
      %9 = sbr.rel (0) target = $region5
    $region4: #{tpu_custom_call.1} parent=1 // pred_region
      %11 = vsyncadd [#allocation3], 0
      %s13 = sshll.u32 %s0, 4
      %s14 = int_to_ptr.hbm [resolvable:$true] %s13
      %s15 = sshll.u32 [#allocation2], 4
      %s16 = int_to_ptr.vmem [resolvable:$true] %s15
      %18 = dma.hbm_to_vmem [thread:$0]  %s14, 256, %s16, [#allocation3]
    $region5: #{tpu_custom_call.1} parent=1 // pred_fallthru
      _
    // Predicated region
    $region6: #{tpu_custom_call.1} parent=1 // pred_check
      _
    $region7: #{tpu_custom_call.1} parent=1 // pred_check_branch
      %20 = sbr.rel (0) target = $region9
    $region8: #{tpu_custom_call.1} parent=1 // pred_region
      %22 = dma.done [#allocation3], 256
    $region9: #{tpu_custom_call.1} parent=1 // pred_fallthru
      _
    %v23 = vld [vmem:[#allocation2] sm:$0xff]
    %v24 = vld [vmem:[#allocation2 + $0x8] sm:$0xff]
    %v25 = vadd.f32 %v23, %v24
    %26 = vadd.xlane.f32.xlu0 %v25
    %v27 = vpop.xlane.xlu0 %26
    %v28 = vmul.f32 %v27, 0.00390625
    %v29 = vsub.f32 %v23, %v28
    %v30 = vsub.f32 %v24, %v28
    %v31 = vmul.f32 %v29, %v29
    %v32 = vmul.f32 %v30, %v30
    %v33 = vadd.f32 %v31, %v32
    %34 = vadd.xlane.f32.xlu0 %v33
    %v35 = vpop.xlane.xlu0 %34
    %v36 = vmul.f32 %v35, 0.00390625
    %v37 = vadd.f32 %v36, 1e-05
    %v38 = vrsqrt.pop %v37
    %v39 = vmul.f32 %v38, %v37
    %v40 = vmul.f32 %v39, %v38
    %v41 = vmul.f32 0.5, %v40
    %v42 = vsub.f32 1.5, %v41
    %v43 = vmul.f32 %v38, %v42
    %vm44 = vweird.f32 %v37
    %vm45 = vweird.f32 %v38
    %vm46 = vmor %vm44, %vm45
    %v47 = vsel %vm46, %v38, %v43
    %v48 = vmul.f32 %v29, %v47
    %v49 = vmul.f32 %v30, %v47
    %50 = vst [vmem:[#allocation5] sm:$0xff] %v48
    %51 = vst [vmem:[#allocation5 + $0x8] sm:$0xff] %v49
    // Predicated region
    $region10: #{tpu_custom_call.1} parent=1 // pred_check
      _
    $region11: #{tpu_custom_call.1} parent=1 // pred_check_branch
      %53 = sbr.rel (0) target = $region13
    $region12: #{tpu_custom_call.1} parent=1 // pred_region
      %55 = vsyncadd [#allocation4], 0
      %s57 = sshll.u32 [#allocation5], 4
      %s58 = int_to_ptr.vmem [resolvable:$true] %s57
      %s59 = sshll.u32 %s1, 4
      %s60 = int_to_ptr.hbm [resolvable:$true] %s59
      %62 = dma.vmem_to_hbm [thread:$0]  %s58, 256, %s60, [#allocation4]
    $region13: #{tpu_custom_call.1} parent=1 // pred_fallthru
      _
    // Predicated region
    $region14: #{tpu_custom_call.1} parent=1 // pred_check
      _
    $region15: #{tpu_custom_call.1} parent=1 // pred_check_branch
      %64 = sbr.rel (0) target = $region17
    $region16: #{tpu_custom_call.1} parent=1 // pred_region
      %66 = dma.done [#allocation4], 256
    $region17: #{tpu_custom_call.1} parent=1 // pred_fallthru
      _
    %67 = vsyncpa [#allocation3], 1
    %68 = vsyncpa [#allocation4], 1

</llo_original>
